<compile_context>
chip_gen: v5e
topology: v5e:2x2
jax: 0.10.0
libtpu: 0.0.40
codegen_flags: <defaults>
</compile_context>

<pallas_src>
import jax
import jax.numpy as jnp
from jax.experimental import pallas as pl
from jax.experimental.pallas import tpu as pltpu

EMB = 64                 # embedding_dimension
LAYER = 64               # args.layer (must equal EMB for the module to compose)
PACK = 2                 # rows packed per 128-lane row
PEMB = PACK * EMB        # 128 lanes
LEAKY_SLOPE = 0.01       # nn.LeakyReLU default negative_slope
DEFAULT_BM = 8192        # original rows per grid step (4096 packed rows)


def _round_up(n, m):
    return ((n + m - 1) // m) * m


def _block_diag2(w):
    """(64,64) -> (128,128) blockdiag([[W,0],[0,W]]).

    A packed row [r0 | r1] times this matrix yields [r0 @ W | r1 @ W]."""
    z = jnp.zeros_like(w)
    return jnp.concatenate(
        [jnp.concatenate([w, z], axis=1),
         jnp.concatenate([z, w], axis=1)], axis=0)


def mlp_kernel(a1_ref,                     # SMEM: PReLU weight, shape (1, 1)
               x_ref, w0_ref, b0_ref,      # VMEM tiles (x f32, W bf16, b f32)
               w1_ref, b1_ref,
               w2_ref, b2_ref,
               o_ref):
    # Hoisted scalar read (PReLU shared parameter `a`).
    a = a1_ref[0, 0]

    x = x_ref[...].astype(jnp.bfloat16)

    # Layer 0: Linear + ReLU   (bf16 operands, f32 accumulate)
    h0 = jnp.dot(x, w0_ref[...], preferred_element_type=jnp.float32) + b0_ref[...]
    h0 = jnp.maximum(h0, 0.0)

    # Layer 1: Linear + PReLU
    h1 = jnp.dot(h0.astype(jnp.bfloat16), w1_ref[...],
                 preferred_element_type=jnp.float32) + b1_ref[...]
    h1 = jnp.where(h1 >= 0.0, h1, a * h1)

    # Layer 2: Linear + LeakyReLU(0.01)
    h2 = jnp.dot(h1.astype(jnp.bfloat16), w2_ref[...],
                 preferred_element_type=jnp.float32) + b2_ref[...]
    o_ref[...] = jnp.where(h2 >= 0.0, h2, LEAKY_SLOPE * h2)


def pack_params(params):
    """Build the 128-lane-dense (block-diagonal, bf16) weight set once."""
    return {
        "w0p": _block_diag2(params["w0"]).astype(jnp.bfloat16),
        "w1p": _block_diag2(params["w1"]).astype(jnp.bfloat16),
        "w2p": _block_diag2(params["w2"]).astype(jnp.bfloat16),
        "b0p": jnp.concatenate([params["b0"]] * PACK, axis=1),
        "b1p": jnp.concatenate([params["b1"]] * PACK, axis=1),
        "b2p": jnp.concatenate([params["b2"]] * PACK, axis=1),
        "a1": params["a1"],
    }


def mlp_forward(x, params, *, bm=DEFAULT_BM):
    """x: (B, 64) float32 -> (B, 64) float32."""
    B, D = x.shape
    assert D == EMB, f"expected {EMB} input features, got {D}"

    pp = pack_params(params)

    # Pad batch to a multiple of 2*8 so the packed (B/2, 128) view has a
    # sublane-aligned row count; padded rows are sliced off at the end.
    B_pad = _round_up(B, PACK * 8)
    if B_pad != B:
        x = jnp.pad(x, ((0, B_pad - B), (0, 0)))
    Bp = B_pad // PACK
    xp = x.reshape(Bp, PEMB)          # lane-dense packed view (free, row-major)

    # Packed-row tile.  Clamp so (a) tiny batches don't over-allocate and
    # (b) there are >=2 grid steps whenever possible, so the "parallel" batch
    # axis actually shards the work across both v7x TensorCores.
    bm_p = max(8, bm // PACK)
    bm_p = max(8, min(bm_p, _round_up(pl.cdiv(Bp, 2), 8)))
    grid = (pl.cdiv(Bp, bm_p),)

    flops = 3 * 2 * B_pad * EMB * LAYER
    bytes_accessed = (B_pad * EMB * 4 * 2          # x in + output out (f32)
                      + 3 * PEMB * PEMB * 2        # bf16 block-diag weights
                      + 3 * PEMB * 4 + 4)          # biases + PReLU scalar

    out_p = pl.pallas_call(
        mlp_kernel,
        out_shape=jax.ShapeDtypeStruct((Bp, PEMB), jnp.float32),
        grid=grid,
        in_specs=[
            # PReLU scalar parameter lives in SMEM.
            pl.BlockSpec(memory_space=pltpu.MemorySpace.SMEM),
            # Packed activations: tiled along the (packed) batch axis only.
            pl.BlockSpec((bm_p, PEMB), lambda i: (i, 0)),
            # Weights / biases: constant index_map -> DMA'd once, VMEM-resident.
            pl.BlockSpec((PEMB, PEMB), lambda i: (0, 0)),
            pl.BlockSpec((1, PEMB), lambda i: (0, 0)),
            pl.BlockSpec((PEMB, PEMB), lambda i: (0, 0)),
            pl.BlockSpec((1, PEMB), lambda i: (0, 0)),
            pl.BlockSpec((PEMB, PEMB), lambda i: (0, 0)),
            pl.BlockSpec((1, PEMB), lambda i: (0, 0)),
        ],
        out_specs=pl.BlockSpec((bm_p, PEMB), lambda i: (i, 0)),
        compiler_params=pltpu.CompilerParams(
            # Batch grid axis is embarrassingly parallel (v7x megacore).
            dimension_semantics=("parallel",),
            # Explicit budget: ~18 MiB peak at the default tile; raise past the
            # 16 MiB v5e scoped default while staying well under 64 MiB (v7x).
            vmem_limit_bytes=40 * 1024 * 1024),
        cost_estimate=pl.CostEstimate(flops=flops, transcendentals=0,
                                      bytes_accessed=bytes_accessed),
    )(pp["a1"], xp,
      pp["w0p"], pp["b0p"],
      pp["w1p"], pp["b1p"],
      pp["w2p"], pp["b2p"])

    # Undo the 2-row packing and drop padded rows.
    return out_p.reshape(B_pad, LAYER)[:B]


def init_params(key):
    """Deterministic synthetic parameters with PyTorch-like shapes.

    PyTorch nn.Linear stores weight as (out, in); we store the transpose
    (in, out) so the kernel computes x @ W + b (== x @ W_torch.T + b).
    Master copies are kept in float32; bf16 packing happens in pack_params.
    """
    k0, k1, k2, k3, k4, k5 = jax.random.split(key, 6)
    scale = 1.0 / jnp.sqrt(jnp.float32(EMB))
    return {
        "w0": jax.random.uniform(k0, (EMB, EMB), jnp.float32, -scale, scale),
        "b0": jax.random.uniform(k1, (1, EMB), jnp.float32, -scale, scale),
        "w1": jax.random.uniform(k2, (EMB, LAYER), jnp.float32, -scale, scale),
        "b1": jax.random.uniform(k3, (1, LAYER), jnp.float32, -scale, scale),
        "w2": jax.random.uniform(k4, (EMB, LAYER), jnp.float32, -scale, scale),
        "b2": jax.random.uniform(k5, (1, LAYER), jnp.float32, -scale, scale),
        # nn.PReLU default: single shared parameter initialized to 0.25
        "a1": jnp.full((1, 1), 0.25, jnp.float32),
    }


def mlp_reference(x, params):
    """Pure-JAX float32 reference (original module semantics)."""
    h = jnp.maximum(x @ params["w0"] + params["b0"], 0.0)
    h = h @ params["w1"] + params["b1"]
    a = params["a1"][0, 0]
    h = jnp.where(h >= 0.0, h, a * h)
    h = h @ params["w2"] + params["b2"]
    return jnp.where(h >= 0.0, h, LEAKY_SLOPE * h)


def mlp_reference_bf16(x, params):
    """Reference emulating the kernel's bf16-operand / f32-accumulate matmuls."""
    def mm(a, w):
        return jnp.dot(a.astype(jnp.bfloat16), w.astype(jnp.bfloat16),
                       preferred_element_type=jnp.float32)
    h = jnp.maximum(mm(x, params["w0"]) + params["b0"], 0.0)
    h = mm(h, params["w1"]) + params["b1"]
    a = params["a1"][0, 0]
    h = jnp.where(h >= 0.0, h, a * h)
    h = mm(h, params["w2"]) + params["b2"]
    return jnp.where(h >= 0.0, h, LEAKY_SLOPE * h)


if __name__ == "__main__":
    key = jax.random.PRNGKey(0)
    kx, kx2, kp = jax.random.split(key, 3)
    params = init_params(kp)

    # Small deterministic check (single grid step, exact packed tile).
    B = 16
    x = jax.random.normal(kx, (B, EMB), jnp.float32)
    out = jax.block_until_ready(mlp_forward(x, params))
    assert out.shape == (B, LAYER)
    assert jnp.allclose(out, mlp_reference_bf16(x, params), atol=1e-3, rtol=1e-3), \
        "mismatch vs bf16-emulated reference"
    assert jnp.allclose(out, mlp_reference(x, params), atol=5e-2, rtol=5e-2), \
        "mismatch vs f32 reference"

    # Multi-step grid, odd batch: exercises padding, the packed view, and a
    # ragged last tile (bm override keeps the test fast with >1 grid step).
    B2 = 519
    x2 = jax.random.normal(kx2, (B2, EMB), jnp.float32)
    out2 = jax.block_until_ready(mlp_forward(x2, params, bm=256))
    assert out2.shape == (B2, LAYER)
    assert jnp.allclose(out2, mlp_reference_bf16(x2, params), atol=1e-3, rtol=1e-3), \
        "mismatch vs bf16-emulated reference (tiled)"
    assert jnp.allclose(out2, mlp_reference(x2, params), atol=5e-2, rtol=5e-2), \
        "mismatch vs f32 reference (tiled)"

    print("KERNEL_OK")
</pallas_src>

<mosaic_0001>
module attributes {stable_mosaic.version = 11 : i64} {
  func.func @mlp_kernel(%arg0: i32, %arg1: memref<1x1xf32, #tpu.memory_space<smem>>, %arg2: memref<8x128xf32, #tpu.memory_space<vmem>>, %arg3: memref<128x128xbf16, #tpu.memory_space<vmem>>, %arg4: memref<1x128xf32, #tpu.memory_space<vmem>>, %arg5: memref<128x128xbf16, #tpu.memory_space<vmem>>, %arg6: memref<1x128xf32, #tpu.memory_space<vmem>>, %arg7: memref<128x128xbf16, #tpu.memory_space<vmem>>, %arg8: memref<1x128xf32, #tpu.memory_space<vmem>>, %arg9: memref<8x128xf32, #tpu.memory_space<vmem>>) attributes {dimension_semantics = [#tpu.dimension_semantics<parallel>], iteration_bounds = array<i64: 1>, scalar_prefetch = 0 : i64, scratch_operands = 0 : i64, tpu.core_type = #tpu.core_type<tc>, window_params = [{transform_indices = @transform_0, window_bounds = array<i64: 1, 1>}, {transform_indices = @transform_1, window_bounds = array<i64: 8, 128>}, {pipeline_mode = #tpu.pipeline_mode<synchronous>, transform_indices = @transform_2, window_bounds = array<i64: 128, 128>}, {pipeline_mode = #tpu.pipeline_mode<synchronous>, transform_indices = @transform_3, window_bounds = array<i64: 1, 128>}, {pipeline_mode = #tpu.pipeline_mode<synchronous>, transform_indices = @transform_4, window_bounds = array<i64: 128, 128>}, {pipeline_mode = #tpu.pipeline_mode<synchronous>, transform_indices = @transform_5, window_bounds = array<i64: 1, 128>}, {pipeline_mode = #tpu.pipeline_mode<synchronous>, transform_indices = @transform_6, window_bounds = array<i64: 128, 128>}, {pipeline_mode = #tpu.pipeline_mode<synchronous>, transform_indices = @transform_7, window_bounds = array<i64: 1, 128>}, {transform_indices = @transform_8, window_bounds = array<i64: 8, 128>}]} {
    %c0 = arith.constant 0 : index
    %c0_0 = arith.constant 0 : index
    %0 = memref.load %arg1[%c0, %c0_0] : memref<1x1xf32, #tpu.memory_space<smem>>
    %c0_1 = arith.constant 0 : index
    %c0_2 = arith.constant 0 : index
    %1 = vector.load %arg2[%c0_1, %c0_2] : memref<8x128xf32, #tpu.memory_space<vmem>>, vector<8x128xf32>
    %2 = arith.truncf %1 : vector<8x128xf32> to vector<8x128xbf16>
    %c0_3 = arith.constant 0 : index
    %c0_4 = arith.constant 0 : index
    %3 = vector.load %arg3[%c0_3, %c0_4] : memref<128x128xbf16, #tpu.memory_space<vmem>>, vector<128x128xbf16>
    %cst = arith.constant dense<0.000000e+00> : vector<8x128xf32>
    %4 = tpu.matmul %2, %3, %cst {dimension_numbers = #tpu.dot_dimension_numbers<[1], [0], [0], [1], [0, 0, 1, 1], [], []>} : vector<8x128xbf16>, vector<128x128xbf16>, vector<8x128xf32> -> vector<8x128xf32>
    %c0_5 = arith.constant 0 : index
    %c0_6 = arith.constant 0 : index
    %5 = vector.load %arg4[%c0_5, %c0_6] : memref<1x128xf32, #tpu.memory_space<vmem>>, vector<1x128xf32>
    %6 = vector.broadcast %5 : vector<1x128xf32> to vector<8x128xf32>
    %7 = arith.addf %4, %6 : vector<8x128xf32>
    %cst_7 = arith.constant 0.000000e+00 : f32
    %8 = vector.broadcast %cst_7 : f32 to vector<8x128xf32>
    %9 = arith.maximumf %7, %8 : vector<8x128xf32>
    %10 = arith.truncf %9 : vector<8x128xf32> to vector<8x128xbf16>
    %c0_8 = arith.constant 0 : index
    %c0_9 = arith.constant 0 : index
    %11 = vector.load %arg5[%c0_8, %c0_9] : memref<128x128xbf16, #tpu.memory_space<vmem>>, vector<128x128xbf16>
    %cst_10 = arith.constant dense<0.000000e+00> : vector<8x128xf32>
    %12 = tpu.matmul %10, %11, %cst_10 {dimension_numbers = #tpu.dot_dimension_numbers<[1], [0], [0], [1], [0, 0, 1, 1], [], []>} : vector<8x128xbf16>, vector<128x128xbf16>, vector<8x128xf32> -> vector<8x128xf32>
    %c0_11 = arith.constant 0 : index
    %c0_12 = arith.constant 0 : index
    %13 = vector.load %arg6[%c0_11, %c0_12] : memref<1x128xf32, #tpu.memory_space<vmem>>, vector<1x128xf32>
    %14 = vector.broadcast %13 : vector<1x128xf32> to vector<8x128xf32>
    %15 = arith.addf %12, %14 : vector<8x128xf32>
    %cst_13 = arith.constant 0.000000e+00 : f32
    %16 = vector.broadcast %cst_13 : f32 to vector<8x128xf32>
    %17 = arith.cmpf oge, %15, %16 : vector<8x128xf32>
    %18 = vector.broadcast %0 : f32 to vector<8x128xf32>
    %19 = arith.mulf %18, %15 : vector<8x128xf32>
    %20 = arith.select %17, %15, %19 : vector<8x128xi1>, vector<8x128xf32>
    %21 = arith.truncf %20 : vector<8x128xf32> to vector<8x128xbf16>
    %c0_14 = arith.constant 0 : index
    %c0_15 = arith.constant 0 : index
    %22 = vector.load %arg7[%c0_14, %c0_15] : memref<128x128xbf16, #tpu.memory_space<vmem>>, vector<128x128xbf16>
    %cst_16 = arith.constant dense<0.000000e+00> : vector<8x128xf32>
    %23 = tpu.matmul %21, %22, %cst_16 {dimension_numbers = #tpu.dot_dimension_numbers<[1], [0], [0], [1], [0, 0, 1, 1], [], []>} : vector<8x128xbf16>, vector<128x128xbf16>, vector<8x128xf32> -> vector<8x128xf32>
    %c0_17 = arith.constant 0 : index
    %c0_18 = arith.constant 0 : index
    %24 = vector.load %arg8[%c0_17, %c0_18] : memref<1x128xf32, #tpu.memory_space<vmem>>, vector<1x128xf32>
    %25 = vector.broadcast %24 : vector<1x128xf32> to vector<8x128xf32>
    %26 = arith.addf %23, %25 : vector<8x128xf32>
    %cst_19 = arith.constant 0.000000e+00 : f32
    %27 = vector.broadcast %cst_19 : f32 to vector<8x128xf32>
    %28 = arith.cmpf oge, %26, %27 : vector<8x128xf32>
    %cst_20 = arith.constant 0.00999999977 : f32
    %29 = vector.broadcast %cst_20 : f32 to vector<8x128xf32>
    %30 = arith.mulf %29, %26 : vector<8x128xf32>
    %31 = arith.select %28, %26, %30 : vector<8x128xi1>, vector<8x128xf32>
    %c0_21 = arith.constant 0 : index
    %c0_22 = arith.constant 0 : index
    %32 = vector.load %arg9[%c0_21, %c0_22] : memref<8x128xf32, #tpu.memory_space<vmem>>, vector<8x128xf32>
    tpu.vector_store %arg9[%c0_21, %c0_22], %31 {strides = array<i32>} : memref<8x128xf32, #tpu.memory_space<vmem>>, vector<8x128xf32>,
    return
  }
  func.func @transform_0(%arg0: i32) -> (i32, i32) {
    %c0_i32 = arith.constant 0 : i32
    %c0_i32_0 = arith.constant 0 : i32
    %c0_i32_1 = arith.constant 0 : i32
    return %c0_i32, %c0_i32_0 : i32, i32
  }
  func.func @transform_1(%arg0: i32) -> (i32, i32) {
    %c0_i32 = arith.constant 0 : i32
    %c0_i32_0 = arith.constant 0 : i32
    return %arg0, %c0_i32 : i32, i32
  }
  func.func @transform_2(%arg0: i32) -> (i32, i32) {
    %c0_i32 = arith.constant 0 : i32
    %c0_i32_0 = arith.constant 0 : i32
    %c0_i32_1 = arith.constant 0 : i32
    return %c0_i32, %c0_i32_0 : i32, i32
  }
  func.func @transform_3(%arg0: i32) -> (i32, i32) {
    %c0_i32 = arith.constant 0 : i32
    %c0_i32_0 = arith.constant 0 : i32
    %c0_i32_1 = arith.constant 0 : i32
    return %c0_i32, %c0_i32_0 : i32, i32
  }
  func.func @transform_4(%arg0: i32) -> (i32, i32) {
    %c0_i32 = arith.constant 0 : i32
    %c0_i32_0 = arith.constant 0 : i32
    %c0_i32_1 = arith.constant 0 : i32
    return %c0_i32, %c0_i32_0 : i32, i32
  }
  func.func @transform_5(%arg0: i32) -> (i32, i32) {
    %c0_i32 = arith.constant 0 : i32
    %c0_i32_0 = arith.constant 0 : i32
    %c0_i32_1 = arith.constant 0 : i32
    return %c0_i32, %c0_i32_0 : i32, i32
  }
  func.func @transform_6(%arg0: i32) -> (i32, i32) {
    %c0_i32 = arith.constant 0 : i32
    %c0_i32_0 = arith.constant 0 : i32
    %c0_i32_1 = arith.constant 0 : i32
    return %c0_i32, %c0_i32_0 : i32, i32
  }
  func.func @transform_7(%arg0: i32) -> (i32, i32) {
    %c0_i32 = arith.constant 0 : i32
    %c0_i32_0 = arith.constant 0 : i32
    %c0_i32_1 = arith.constant 0 : i32
    return %c0_i32, %c0_i32_0 : i32, i32
  }
  func.func @transform_8(%arg0: i32) -> (i32, i32) {
    %c0_i32 = arith.constant 0 : i32
    %c0_i32_0 = arith.constant 0 : i32
    return %arg0, %c0_i32 : i32, i32
  }
}

</mosaic_0001>

<llo_original>
// kernel: tpu_custom_call.1
$region0: #{tpu_custom_call.1}
  #allocation0 [shape = 'u32[]', space=smem, size = 0x4, offset = 0x4, fixed_abs, tag = 'smem constant byte address 0x4 - core index']
  #allocation1 [shape = 'u32[72,128]{1,0:T(1,128)}', space=vmem, size = 0x9000, scoped, tag = 'internal scratch']
  #allocation2 [shape = 'f32[1,1]{1,0:T(1,128)S(6)}', space=smem, size = 0x200, scoped, tag = 'scoped memory for tpu_custom_call.1']
  %s0 = inlined_call_operand.<no memory space> [shape: f32[1,1], index: 0, kind: input, shape index: {}]
  %s1 = inlined_call_operand.hbm [shape: f32[8,128], index: 1, kind: input, shape index: {}]
  %s2 = inlined_call_operand.hbm [shape: bf16[128,128], index: 2, kind: input, shape index: {}]
  %s3 = inlined_call_operand.vmem [shape: f32[1,128], index: 3, kind: input, shape index: {}]
  %s4 = inlined_call_operand.hbm [shape: bf16[128,128], index: 4, kind: input, shape index: {}]
  %s5 = inlined_call_operand.vmem [shape: f32[1,128], index: 5, kind: input, shape index: {}]
  %s6 = inlined_call_operand.hbm [shape: bf16[128,128], index: 6, kind: input, shape index: {}]
  %s7 = inlined_call_operand.vmem [shape: f32[1,128], index: 7, kind: input, shape index: {}]
  %s8 = inlined_call_operand.hbm [shape: f32[8,128], index: 8, kind: output, shape index: {}]
  %s9 = sld [smem:[#allocation0]]
  $region58: #{tpu_custom_call.1} parent=0
    _
  %s11 = ssub.s32 1, %s9
  %s12 = scalar_select 0, %s11, %s9
  %13 = sst [smem:[#allocation2]] %s0
  $region1: #{tpu_custom_call.1} parent=0
    #allocation3 [shape = 'u8[4096]{0}', space=vmem, size = 0x1000, scoped, tag = 'input window, operand 1, single buffered']
    #allocation4 [shape = 's32[1]{0}', space=sflag, size = 0x4, scoped, tag = 'scoped memory for tpu_custom_call.1']
    #allocation5 [shape = 's32[1]{0}', space=sflag, size = 0x4, scoped, tag = 'scoped memory for tpu_custom_call.1']
    #allocation6 [shape = 'u8[32768]{0}', space=vmem, size = 0x8000, scoped, tag = 'input window, operand 2, single buffered']
    #allocation7 [shape = 's32[1]{0}', space=sflag, size = 0x4, scoped, tag = 'scoped memory for tpu_custom_call.1']
    #allocation8 [shape = 'u8[32768]{0}', space=vmem, size = 0x8000, scoped, tag = 'input window, operand 4, single buffered']
    #allocation9 [shape = 'u8[32768]{0}', space=vmem, size = 0x8000, scoped, tag = 'input window, operand 6, single buffered']
    #allocation10 [shape = 's32[1]{0}', space=sflag, size = 0x4, scoped, tag = 'scoped memory for tpu_custom_call.1']
    #allocation11 [shape = 'u8[4096]{0}', space=vmem, size = 0x1000, scoped, tag = 'output window, operand 0, single buffered']
    %14 = vsyncpa [#allocation4], 0
    %15 = vsyncpa [#allocation7], 0
    %16 = vsyncpa [#allocation10], 0
    %17 = vsyncpa [#allocation5], 0
    // Predicated region
    $region2: #{tpu_custom_call.1} parent=1 // pred_check
      _
    $region3: #{tpu_custom_call.1} parent=1 // pred_check_branch
      %19 = sbr.rel (0) target = $region5
    $region4: #{tpu_custom_call.1} parent=1 // pred_region
      _
    $region5: #{tpu_custom_call.1} parent=1 // pred_fallthru
      _
    // Predicated region
    $region6: #{tpu_custom_call.1} parent=1 // pred_check
      _
    $region7: #{tpu_custom_call.1} parent=1 // pred_check_branch
      %21 = sbr.rel (0) target = $region9
    $region8: #{tpu_custom_call.1} parent=1 // pred_region
      %23 = vsyncadd [#allocation4], 0
      %s25 = sshll.u32 %s1, 4
      %s26 = int_to_ptr.hbm [resolvable:$true] %s25
      %s27 = sshll.u32 [#allocation3], 4
      %s28 = int_to_ptr.vmem [resolvable:$true] %s27
      %30 = dma.hbm_to_vmem [thread:$0]  %s26, 128, %s28, [#allocation4]
    $region9: #{tpu_custom_call.1} parent=1 // pred_fallthru
      _
    // Predicated region
    $region10: #{tpu_custom_call.1} parent=1 // pred_check
      _
    $region11: #{tpu_custom_call.1} parent=1 // pred_check_branch
      %32 = sbr.rel (0) target = $region13
    $region12: #{tpu_custom_call.1} parent=1 // pred_region
      %34 = vsyncadd [#allocation7], 0
      %s35 = sshll.u32 %s2, 4
      %s36 = int_to_ptr.hbm [resolvable:$true] %s35
      %s37 = sshll.u32 [#allocation6], 4
      %s38 = int_to_ptr.vmem [resolvable:$true] %s37
      %43 = dma.hbm_to_vmem [thread:$0]  %s36, 1024, %s38, [#allocation7], 64, 64, 4
    $region13: #{tpu_custom_call.1} parent=1 // pred_fallthru
      _
    // Predicated region
    $region14: #{tpu_custom_call.1} parent=1 // pred_check
      _
    $region15: #{tpu_custom_call.1} parent=1 // pred_check_branch
      %45 = sbr.rel (0) target = $region17
    $region16: #{tpu_custom_call.1} parent=1 // pred_region
      _
    $region17: #{tpu_custom_call.1} parent=1 // pred_fallthru
      _
    // Predicated region
    $region18: #{tpu_custom_call.1} parent=1 // pred_check
      _
    $region19: #{tpu_custom_call.1} parent=1 // pred_check_branch
      %47 = sbr.rel (0) target = $region21
    $region20: #{tpu_custom_call.1} parent=1 // pred_region
      %49 = vsyncadd [#allocation7], 0
      %s50 = sshll.u32 %s4, 4
      %s51 = int_to_ptr.hbm [resolvable:$true] %s50
      %s52 = sshll.u32 [#allocation8], 4
      %s53 = int_to_ptr.vmem [resolvable:$true] %s52
      %58 = dma.hbm_to_vmem [thread:$0]  %s51, 1024, %s53, [#allocation7], 64, 64, 4
    $region21: #{tpu_custom_call.1} parent=1 // pred_fallthru
      _
    // Predicated region
    $region22: #{tpu_custom_call.1} parent=1 // pred_check
      _
    $region23: #{tpu_custom_call.1} parent=1 // pred_check_branch
      %60 = sbr.rel (0) target = $region25
    $region24: #{tpu_custom_call.1} parent=1 // pred_region
      _
    $region25: #{tpu_custom_call.1} parent=1 // pred_fallthru
      _
    // Predicated region
    $region26: #{tpu_custom_call.1} parent=1 // pred_check
      _
    $region27: #{tpu_custom_call.1} parent=1 // pred_check_branch
      %62 = sbr.rel (0) target = $region29
    $region28: #{tpu_custom_call.1} parent=1 // pred_region
      %64 = vsyncadd [#allocation10], 0
      %s65 = sshll.u32 %s6, 4
      %s66 = int_to_ptr.hbm [resolvable:$true] %s65
      %s67 = sshll.u32 [#allocation9], 4
      %s68 = int_to_ptr.vmem [resolvable:$true] %s67
      %73 = dma.hbm_to_vmem [thread:$0]  %s66, 1024, %s68, [#allocation10], 64, 64, 4
    $region29: #{tpu_custom_call.1} parent=1 // pred_fallthru
      _
    // Predicated region
    $region30: #{tpu_custom_call.1} parent=1 // pred_check
      _
    $region31: #{tpu_custom_call.1} parent=1 // pred_check_branch
      %75 = sbr.rel (0) target = $region33
    $region32: #{tpu_custom_call.1} parent=1 // pred_region
      _
    $region33: #{tpu_custom_call.1} parent=1 // pred_fallthru
      _
    // Predicated region
    $region34: #{tpu_custom_call.1} parent=1 // pred_check
      _
    $region35: #{tpu_custom_call.1} parent=1 // pred_check_branch
      %77 = sbr.rel (0) target = $region37
    $region36: #{tpu_custom_call.1} parent=1 // pred_region
      %79 = dma.done [#allocation4], 128
    $region37: #{tpu_custom_call.1} parent=1 // pred_fallthru
      _
    // Predicated region
    $region38: #{tpu_custom_call.1} parent=1 // pred_check
      _
    $region39: #{tpu_custom_call.1} parent=1 // pred_check_branch
      %81 = sbr.rel (0) target = $region41
    $region40: #{tpu_custom_call.1} parent=1 // pred_region
      %83 = dma.done [#allocation7], 1024
    $region41: #{tpu_custom_call.1} parent=1 // pred_fallthru
      _
    // Predicated region
    $region42: #{tpu_custom_call.1} parent=1 // pred_check
      _
    $region43: #{tpu_custom_call.1} parent=1 // pred_check_branch
      %85 = sbr.rel (0) target = $region45
    $region44: #{tpu_custom_call.1} parent=1 // pred_region
      %87 = dma.done [#allocation7], 1024
    $region45: #{tpu_custom_call.1} parent=1 // pred_fallthru
      _
    // Predicated region
    $region46: #{tpu_custom_call.1} parent=1 // pred_check
      _
    $region47: #{tpu_custom_call.1} parent=1 // pred_check_branch
      %89 = sbr.rel (0) target = $region49
    $region48: #{tpu_custom_call.1} parent=1 // pred_region
      %91 = dma.done [#allocation10], 1024
    $region49: #{tpu_custom_call.1} parent=1 // pred_fallthru
      _
    %s92 = sld [smem:[#allocation2]]
    %v93 = vld [vmem:[#allocation3] sm:$0xff]
    %v94 = vpack.c.bf16 %v93, %v93
    %v95 = vld [vmem:[#allocation6] sm:$0xf]
    %v96 = vld [vmem:[#allocation6 + $0x4] sm:$0xf]
    %v97 = vld [vmem:[#allocation6 + $0x8] sm:$0xf]
    %v98 = vld [vmem:[#allocation6 + $0xc] sm:$0xf]
    %v99 = vld [vmem:[#allocation6 + $0x10] sm:$0xf]
    %v100 = vld [vmem:[#allocation6 + $0x14] sm:$0xf]
    %v101 = vld [vmem:[#allocation6 + $0x18] sm:$0xf]
    %v102 = vld [vmem:[#allocation6 + $0x1c] sm:$0xf]
    %v103 = vld [vmem:[#allocation6 + $0x20] sm:$0xf]
    %v104 = vld [vmem:[#allocation6 + $0x24] sm:$0xf]
    %v105 = vld [vmem:[#allocation6 + $0x28] sm:$0xf]
    %v106 = vld [vmem:[#allocation6 + $0x2c] sm:$0xf]
    %v107 = vld [vmem:[#allocation6 + $0x30] sm:$0xf]
    %v108 = vld [vmem:[#allocation6 + $0x34] sm:$0xf]
    %v109 = vld [vmem:[#allocation6 + $0x38] sm:$0xf]
    %v110 = vld [vmem:[#allocation6 + $0x3c] sm:$0xf]
    %v111 = vld [vmem:[%s3] sm:$0x1]
    %v113 = vperm.slane %v111, 0
    %v131 = vunpack.c.l.b16 %v95
    %v132 = vunpack.c.l.b16 %v96
    %v133 = vunpack.c.l.b16 %v97
    %v134 = vunpack.c.l.b16 %v98
    %v135 = vunpack.c.l.b16 %v99
    %v136 = vunpack.c.l.b16 %v100
    %v137 = vunpack.c.l.b16 %v101
    %v138 = vunpack.c.l.b16 %v102
    %v139 = vunpack.c.l.b16 %v103
    %v140 = vunpack.c.l.b16 %v104
    %v141 = vunpack.c.l.b16 %v105
    %v142 = vunpack.c.l.b16 %v106
    %v143 = vunpack.c.l.b16 %v107
    %v144 = vunpack.c.l.b16 %v108
    %v145 = vunpack.c.l.b16 %v109
    %v146 = vunpack.c.l.b16 %v110
    %v147 = vpack.c.b16 %v132, %v131
    %v148 = vpack.c.b16 %v134, %v133
    %v149 = vpack.c.b16 %v136, %v135
    %v150 = vpack.c.b16 %v138, %v137
    %v151 = vpack.c.b16 %v140, %v139
    %v152 = vpack.c.b16 %v142, %v141
    %v153 = vpack.c.b16 %v144, %v143
    %v154 = vpack.c.b16 %v146, %v145
    %163 = vmatpush.bf16.msra.mxu0 %v154
    %164 = vmatpush.bf16.msra.mxu0 %v153
    %165 = vmatpush.bf16.msra.mxu0 %v152
    %166 = vmatpush.bf16.msra.mxu0 %v151
    %167 = vmatpush.bf16.msra.mxu0 %v150
    %168 = vmatpush.bf16.msra.mxu0 %v149
    %169 = vmatpush.bf16.msra.mxu0 %v148
    %170 = vmatpush.bf16.msra.mxu0 %v147
    %171 = vmatmul.bf16.gmra.mxu0 %v94
    %v172 = vpop.f32.mrf.mxu0
    %v173 = vadd.f32 %v113, %v172
    %v174 = vpop.f32.mrf.mxu0
    %175 = vdwg.mxu0
    %v176 = vmax.f32 %v173, 0.0
    %v177 = vpack.c.bf16 %v176, %v176
    %v178 = vld [vmem:[#allocation8] sm:$0xf]
    %v179 = vld [vmem:[#allocation8 + $0x4] sm:$0xf]
    %v180 = vld [vmem:[#allocation8 + $0x8] sm:$0xf]
    %v181 = vld [vmem:[#allocation8 + $0xc] sm:$0xf]
    %v182 = vld [vmem:[#allocation8 + $0x10] sm:$0xf]
    %v183 = vld [vmem:[#allocation8 + $0x14] sm:$0xf]
    %v184 = vld [vmem:[#allocation8 + $0x18] sm:$0xf]
    %v185 = vld [vmem:[#allocation8 + $0x1c] sm:$0xf]
    %v186 = vld [vmem:[#allocation8 + $0x20] sm:$0xf]
    %v187 = vld [vmem:[#allocation8 + $0x24] sm:$0xf]
    %v188 = vld [vmem:[#allocation8 + $0x28] sm:$0xf]
    %v189 = vld [vmem:[#allocation8 + $0x2c] sm:$0xf]
    %v190 = vld [vmem:[#allocation8 + $0x30] sm:$0xf]
    %v191 = vld [vmem:[#allocation8 + $0x34] sm:$0xf]
    %v192 = vld [vmem:[#allocation8 + $0x38] sm:$0xf]
    %v193 = vld [vmem:[#allocation8 + $0x3c] sm:$0xf]
    %v194 = vld [vmem:[%s5] sm:$0x1]
    %v196 = vperm.slane %v194, 0
    %v214 = vunpack.c.l.b16 %v178
    %v215 = vunpack.c.l.b16 %v179
    %v216 = vunpack.c.l.b16 %v180
    %v217 = vunpack.c.l.b16 %v181
    %v218 = vunpack.c.l.b16 %v182
    %v219 = vunpack.c.l.b16 %v183
    %v220 = vunpack.c.l.b16 %v184
    %v221 = vunpack.c.l.b16 %v185
    %v222 = vunpack.c.l.b16 %v186
    %v223 = vunpack.c.l.b16 %v187
    %v224 = vunpack.c.l.b16 %v188
    %v225 = vunpack.c.l.b16 %v189
    %v226 = vunpack.c.l.b16 %v190
    %v227 = vunpack.c.l.b16 %v191
    %v228 = vunpack.c.l.b16 %v192
    %v229 = vunpack.c.l.b16 %v193
    %v230 = vpack.c.b16 %v215, %v214
    %v231 = vpack.c.b16 %v217, %v216
    %v232 = vpack.c.b16 %v219, %v218
    %v233 = vpack.c.b16 %v221, %v220
    %v234 = vpack.c.b16 %v223, %v222
    %v235 = vpack.c.b16 %v225, %v224
    %v236 = vpack.c.b16 %v227, %v226
    %v237 = vpack.c.b16 %v229, %v228
    %246 = vmatpush.bf16.msra.mxu0 %v237
    %247 = vmatpush.bf16.msra.mxu0 %v236
    %248 = vmatpush.bf16.msra.mxu0 %v235
    %249 = vmatpush.bf16.msra.mxu0 %v234
    %250 = vmatpush.bf16.msra.mxu0 %v233
    %251 = vmatpush.bf16.msra.mxu0 %v232
    %252 = vmatpush.bf16.msra.mxu0 %v231
    %253 = vmatpush.bf16.msra.mxu0 %v230
    %254 = vmatmul.bf16.gmra.mxu0 %v177
    %v255 = vpop.f32.mrf.mxu0
    %v256 = vadd.f32 %v196, %v255
    %v257 = vpop.f32.mrf.mxu0
    %258 = vdwg.mxu0
    %vm259 = vcmp.ge.f32.partialorder %v256, 0.0
    %v260 = vstv %s92
    %v261 = vmul.f32 %v260, %v256
    %v262 = vsel %vm259, %v256, %v261
    %v263 = vpack.c.bf16 %v262, %v262
    %v264 = vld [vmem:[#allocation9] sm:$0xf]
    %v265 = vld [vmem:[#allocation9 + $0x4] sm:$0xf]
    %v266 = vld [vmem:[#allocation9 + $0x8] sm:$0xf]
    %v267 = vld [vmem:[#allocation9 + $0xc] sm:$0xf]
    %v268 = vld [vmem:[#allocation9 + $0x10] sm:$0xf]
    %v269 = vld [vmem:[#allocation9 + $0x14] sm:$0xf]
    %v270 = vld [vmem:[#allocation9 + $0x18] sm:$0xf]
    %v271 = vld [vmem:[#allocation9 + $0x1c] sm:$0xf]
    %v272 = vld [vmem:[#allocation9 + $0x20] sm:$0xf]
    %v273 = vld [vmem:[#allocation9 + $0x24] sm:$0xf]
    %v274 = vld [vmem:[#allocation9 + $0x28] sm:$0xf]
    %v275 = vld [vmem:[#allocation9 + $0x2c] sm:$0xf]
    %v276 = vld [vmem:[#allocation9 + $0x30] sm:$0xf]
    %v277 = vld [vmem:[#allocation9 + $0x34] sm:$0xf]
    %v278 = vld [vmem:[#allocation9 + $0x38] sm:$0xf]
    %v279 = vld [vmem:[#allocation9 + $0x3c] sm:$0xf]
    %v280 = vld [vmem:[%s7] sm:$0x1]
    %v282 = vperm.slane %v280, 0
    %v300 = vunpack.c.l.b16 %v264
    %v301 = vunpack.c.l.b16 %v265
    %v302 = vunpack.c.l.b16 %v266
    %v303 = vunpack.c.l.b16 %v267
    %v304 = vunpack.c.l.b16 %v268
    %v305 = vunpack.c.l.b16 %v269
    %v306 = vunpack.c.l.b16 %v270
    %v307 = vunpack.c.l.b16 %v271
    %v308 = vunpack.c.l.b16 %v272
    %v309 = vunpack.c.l.b16 %v273
    %v310 = vunpack.c.l.b16 %v274
    %v311 = vunpack.c.l.b16 %v275
    %v312 = vunpack.c.l.b16 %v276
    %v313 = vunpack.c.l.b16 %v277
    %v314 = vunpack.c.l.b16 %v278
    %v315 = vunpack.c.l.b16 %v279
    %v316 = vpack.c.b16 %v301, %v300
    %v317 = vpack.c.b16 %v303, %v302
    %v318 = vpack.c.b16 %v305, %v304
    %v319 = vpack.c.b16 %v307, %v306
    %v320 = vpack.c.b16 %v309, %v308
    %v321 = vpack.c.b16 %v311, %v310
    %v322 = vpack.c.b16 %v313, %v312
    %v323 = vpack.c.b16 %v315, %v314
    %332 = vmatpush.bf16.msra.mxu0 %v323
    %333 = vmatpush.bf16.msra.mxu0 %v322
    %334 = vmatpush.bf16.msra.mxu0 %v321
    %335 = vmatpush.bf16.msra.mxu0 %v320
    %336 = vmatpush.bf16.msra.mxu0 %v319
    %337 = vmatpush.bf16.msra.mxu0 %v318
    %338 = vmatpush.bf16.msra.mxu0 %v317
    %339 = vmatpush.bf16.msra.mxu0 %v316
    %340 = vmatmul.bf16.gmra.mxu0 %v263
    %v341 = vpop.f32.mrf.mxu0
    %v342 = vadd.f32 %v282, %v341
    %v343 = vpop.f32.mrf.mxu0
    %344 = vdwg.mxu0
    %vm345 = vcmp.ge.f32.partialorder %v342, 0.0
    %v346 = vmul.f32 %v342, 0.01
    %v347 = vsel %vm345, %v342, %v346
    %348 = vst [vmem:[#allocation11] sm:$0xff] %v347
    // Predicated region
    $region50: #{tpu_custom_call.1} parent=1 // pred_check
      _
    $region51: #{tpu_custom_call.1} parent=1 // pred_check_branch
      %350 = sbr.rel (0) target = $region53
    $region52: #{tpu_custom_call.1} parent=1 // pred_region
      %352 = vsyncadd [#allocation5], 0
      %s354 = sshll.u32 [#allocation11], 4
      %s355 = int_to_ptr.vmem [resolvable:$true] %s354
      %s356 = sshll.u32 %s8, 4
      %s357 = int_to_ptr.hbm [resolvable:$true] %s356
      %359 = dma.vmem_to_hbm [thread:$0]  %s355, 128, %s357, [#allocation5]
    $region53: #{tpu_custom_call.1} parent=1 // pred_fallthru
      _
    // Predicated region
    $region54: #{tpu_custom_call.1} parent=1 // pred_check
      _
    $region55: #{tpu_custom_call.1} parent=1 // pred_check_branch
      %361 = sbr.rel (0) target = $region57
    $region56: #{tpu_custom_call.1} parent=1 // pred_region
      %363 = dma.done [#allocation5], 128
    $region57: #{tpu_custom_call.1} parent=1 // pred_fallthru
      _
    %364 = vsyncpa [#allocation4], 1
    %365 = vsyncpa [#allocation7], 1
    %366 = vsyncpa [#allocation10], 1
    %367 = vsyncpa [#allocation5], 1

</llo_original>
